<compile_context>
chip_gen: v6e
topology: v6e:2x2x1
jax: 0.10.0
libtpu: 0.0.40
codegen_flags: <defaults>
</compile_context>

<pallas_src>
import functools

import jax
import jax.numpy as jnp
from jax.experimental import pallas as pl
from jax.experimental.pallas import tpu as pltpu


_LANES = 128
_MAX_TILE_LANES = 8192      # 8 sublanes * 8192 lanes * 4 B = 256 KiB per block


# ----------------------------------------------------------------------------
# Static-p power helpers (trace-time specialization, no transcendental hazard)
# ----------------------------------------------------------------------------
def _pow_static(x, p):
    """x ** p with an integer fast path (p is a static Python float)."""
    pf = float(p)
    if pf.is_integer() and 1 <= int(pf) <= 16:
        n = int(pf)
        result = None
        base = x
        while n:                       # exponentiation by squaring (VPU only)
            if n & 1:
                result = base if result is None else result * base
            n >>= 1
            if n:
                base = base * base
        return result
    return x ** pf                     # generic float power (forward-safe at 0)


def _root_static(c, p):
    """c ** (1/p) with fast paths for p in {1, 2}."""
    pf = float(p)
    if pf == 1.0:
        return c
    if pf == 2.0:
        return jnp.sqrt(c)
    return c ** (1.0 / pf)


# ----------------------------------------------------------------------------
# Fused Wasserstein cost kernel (lane-dense, tiled lane axis, SMEM accumulator)
# ----------------------------------------------------------------------------
def _wcost_kernel(p, apply_root, packed_ref, o_ref):
    i = pl.program_id(0)
    x = packed_ref[...]                              # (8, TILE) f32
    d = jnp.abs(x[0:2, :] - x[2:4, :])               # full-width VPU abs-diff
    l1 = d[0:1, :] + d[1:2, :]                       # per-point L1 (internal_p=1)
    part = jnp.sum(_pow_static(l1, p))               # scalar partial sum

    @pl.when(i == 0)
    def _init():
        o_ref[0, 0] = 0.0

    o_ref[0, 0] += part

    if apply_root:
        @pl.when(i == pl.num_programs(0) - 1)
        def _finalize():
            o_ref[0, 0] = _root_static(o_ref[0, 0], p)


@functools.partial(jax.jit, static_argnames=("p", "apply_root"))
def _packed_cost(lhs, rhs, *, p, apply_root):
    """lhs, rhs: (T, 2) matched rows -> scalar Wasserstein cost."""
    T = lhs.shape[0]
    Kp = _LANES * max(1, pl.cdiv(T, _LANES))
    if Kp <= _MAX_TILE_LANES:
        tile = Kp
    else:
        tile = _MAX_TILE_LANES
        Kp = tile * pl.cdiv(Kp, tile)
    n_tiles = Kp // tile

    rows = jnp.stack([lhs[:, 0], lhs[:, 1], rhs[:, 0], rhs[:, 1]],
                     axis=0).astype(jnp.float32)     # (4, T)
    packed = jnp.zeros((8, Kp), jnp.float32).at[:4, :T].set(rows)

    cost_est = pl.CostEstimate(flops=5 * Kp, transcendentals=0,
                               bytes_accessed=8 * Kp * 4 + 4)

    out = pl.pallas_call(
        functools.partial(_wcost_kernel, float(p), bool(apply_root)),
        grid=(n_tiles,),
        in_specs=[pl.BlockSpec((8, tile), lambda i: (0, i))],
        out_specs=pl.BlockSpec(memory_space=pltpu.MemorySpace.SMEM),
        out_shape=jax.ShapeDtypeStruct((1, 1), jnp.float32),
        compiler_params=pltpu.CompilerParams(
            dimension_semantics=("arbitrary",)),     # lane axis is a reduction
        cost_estimate=cost_est,
    )(packed)
    return out[0, 0]


# ----------------------------------------------------------------------------
# Matching surrogate + degenerate cases (all under jit; shapes are static)
# ----------------------------------------------------------------------------
def _diag_proj(dgm):
    """Diagonal projection (b, b) of each diagram point."""
    return jnp.stack([dgm[:, 0], dgm[:, 0]], axis=-1)


@functools.partial(jax.jit, static_argnames=("p",))
def _unpaired_cost(dgm, *, p):
    # Reference: sum((death - birth)^p), NO p-th root.
    return _packed_cost(dgm, _diag_proj(dgm), p=p, apply_root=False)


@functools.partial(jax.jit, static_argnames=("p",))
def _surrogate_distance(dgm1, dgm2, *, p):
    # TODO(synk): gudhi wasserstein_distance(matching=True, internal_p=1) is a
    # combinatorial optimal-transport (Hungarian-style) solver with no Pallas
    # equivalent; a deterministic lifetime-sorted matching is used, and
    # leftover points of the larger diagram are matched to their diagonal
    # projection (cost == lifetime, matching the reference's unpaired term).
    m1, m2 = dgm1.shape[0], dgm2.shape[0]
    k = min(m1, m2)
    order1 = jnp.argsort(dgm1[:, 0] - dgm1[:, 1])    # lifetime descending
    order2 = jnp.argsort(dgm2[:, 0] - dgm2[:, 1])
    s1 = dgm1[order1, :]
    s2 = dgm2[order2, :]
    if m1 >= m2:
        lhs = s1                                                    # (t, 2)
        rhs = jnp.concatenate([s2, _diag_proj(s1[k:, :])], axis=0)  # (t, 2)
    else:
        lhs = jnp.concatenate([s1, _diag_proj(s2[k:, :])], axis=0)
        rhs = s2
    return _packed_cost(lhs, rhs, p=p, apply_root=True)


class WassersteinDistance:
    """JAX/Pallas analogue of the PyTorch WassersteinDistance module."""

    def __init__(self, p):
        self.p = float(p)

    def __call__(self, dgm1, dgm2):
        m1, m2 = int(dgm1.shape[0]), int(dgm2.shape[0])

        # Degenerate cases from the reference: sum of lifetime^p, NO p-th root.
        if m1 == 0 and m2 == 0:
            return jnp.zeros((), jnp.float32)
        if m1 == 0:
            return _unpaired_cost(dgm2, p=self.p)
        if m2 == 0:
            return _unpaired_cost(dgm1, p=self.p)

        return _surrogate_distance(dgm1, dgm2, p=self.p)


if __name__ == "__main__":
    key = jax.random.PRNGKey(0)
    k1, k2, k3, k4 = jax.random.split(key, 4)

    m1, m2 = 12, 9                         # small persistence diagrams (M, 2)
    b1 = jax.random.uniform(k1, (m1,), jnp.float32)
    l1 = jax.random.uniform(k2, (m1,), jnp.float32)
    dgm1 = jnp.stack([b1, b1 + l1], axis=-1)
    b2 = jax.random.uniform(k3, (m2,), jnp.float32)
    l2 = jax.random.uniform(k4, (m2,), jnp.float32)
    dgm2 = jnp.stack([b2, b2 + l2], axis=-1)

    wd = WassersteinDistance(p=2.0)

    loss = wd(dgm1, dgm2)
    jax.block_until_ready(loss)

    # Exercise the empty-diagram fast path from the reference module.
    empty = jnp.zeros((0, 2), jnp.float32)
    loss_empty = wd(empty, dgm2)
    jax.block_until_ready(loss_empty)

    assert jnp.isfinite(loss) and jnp.isfinite(loss_empty)
    print("KERNEL_OK")
</pallas_src>

<mosaic_0001>
module attributes {stable_mosaic.version = 11 : i64} {
  func.func @_wcost_kernel(%arg0: i32, %arg1: memref<8x128xf32, #tpu.memory_space<vmem>>, %arg2: memref<1x1xf32, #tpu.memory_space<smem>>) attributes {dimension_semantics = [#tpu.dimension_semantics<arbitrary>], iteration_bounds = array<i64: 1>, scalar_prefetch = 0 : i64, scratch_operands = 0 : i64, tpu.core_type = #tpu.core_type<tc>, window_params = [{transform_indices = @transform_0, window_bounds = array<i64: 8, 128>}, {transform_indices = @transform_1, window_bounds = array<i64: 1, 1>}]} {
    %c0 = arith.constant 0 : index
    %c0_0 = arith.constant 0 : index
    %0 = vector.load %arg1[%c0, %c0_0] : memref<8x128xf32, #tpu.memory_space<vmem>>, vector<8x128xf32>
    %1 = vector.extract_strided_slice %0 {offsets = [0, 0], sizes = [2, 128], strides = [1, 1]} : vector<8x128xf32> to vector<2x128xf32>
    %2 = vector.extract_strided_slice %0 {offsets = [2, 0], sizes = [2, 128], strides = [1, 1]} : vector<8x128xf32> to vector<2x128xf32>
    %3 = arith.subf %1, %2 : vector<2x128xf32>
    %4 = math.absf %3 : vector<2x128xf32>
    %5 = vector.extract_strided_slice %4 {offsets = [0, 0], sizes = [1, 128], strides = [1, 1]} : vector<2x128xf32> to vector<1x128xf32>
    %6 = vector.extract_strided_slice %4 {offsets = [1, 0], sizes = [1, 128], strides = [1, 1]} : vector<2x128xf32> to vector<1x128xf32>
    %7 = arith.addf %5, %6 : vector<1x128xf32>
    %8 = arith.mulf %7, %7 : vector<1x128xf32>
    %9 = vector.shape_cast %8 : vector<1x128xf32> to vector<1x1x128xf32>
    %cst = arith.constant dense<0.000000e+00> : vector<1xf32>
    %10 = vector.multi_reduction <add>, %9, %cst [1, 2] : vector<1x1x128xf32> to vector<1xf32>
    %11 = vector.shape_cast %10 : vector<1xf32> to vector<1x1x1xf32>
    %12 = vector.extract %11[0, 0, 0] : f32 from vector<1x1x1xf32>
    %c0_i32 = arith.constant 0 : i32
    %13 = arith.cmpi eq, %arg0, %c0_i32 : i32
    %14 = arith.extui %13 : i1 to i32
    %c0_i32_1 = arith.constant 0 : i32
    %15 = arith.cmpi ne, %14, %c0_i32_1 : i32
    scf.if %15 {
      %cst_8 = arith.constant 0.000000e+00 : f32
      %c0_9 = arith.constant 0 : index
      %c0_10 = arith.constant 0 : index
      %22 = memref.load %arg2[%c0_9, %c0_10] : memref<1x1xf32, #tpu.memory_space<smem>>
      memref.store %cst_8, %arg2[%c0_9, %c0_10] : memref<1x1xf32, #tpu.memory_space<smem>>
    } else {
    }
    %c0_2 = arith.constant 0 : index
    %c0_3 = arith.constant 0 : index
    %16 = memref.load %arg2[%c0_2, %c0_3] : memref<1x1xf32, #tpu.memory_space<smem>>
    %17 = arith.addf %16, %12 : f32
    %c0_4 = arith.constant 0 : index
    %c0_5 = arith.constant 0 : index
    %18 = memref.load %arg2[%c0_4, %c0_5] : memref<1x1xf32, #tpu.memory_space<smem>>
    memref.store %17, %arg2[%c0_4, %c0_5] : memref<1x1xf32, #tpu.memory_space<smem>>
    %c0_i32_6 = arith.constant 0 : i32
    %19 = arith.cmpi eq, %arg0, %c0_i32_6 : i32
    %20 = arith.extui %19 : i1 to i32
    %c0_i32_7 = arith.constant 0 : i32
    %21 = arith.cmpi ne, %20, %c0_i32_7 : i32
    scf.if %21 {
      %c0_8 = arith.constant 0 : index
      %c0_9 = arith.constant 0 : index
      %22 = memref.load %arg2[%c0_8, %c0_9] : memref<1x1xf32, #tpu.memory_space<smem>>
      %23 = math.sqrt %22 : f32
      %c0_10 = arith.constant 0 : index
      %c0_11 = arith.constant 0 : index
      %24 = memref.load %arg2[%c0_10, %c0_11] : memref<1x1xf32, #tpu.memory_space<smem>>
      memref.store %23, %arg2[%c0_10, %c0_11] : memref<1x1xf32, #tpu.memory_space<smem>>
    } else {
    }
    return
  }
  func.func @transform_0(%arg0: i32) -> (i32, i32) {
    %c0_i32 = arith.constant 0 : i32
    %c0_i32_0 = arith.constant 0 : i32
    return %c0_i32, %arg0 : i32, i32
  }
  func.func @transform_1(%arg0: i32) -> (i32, i32) {
    %c0_i32 = arith.constant 0 : i32
    %c0_i32_0 = arith.constant 0 : i32
    %c0_i32_1 = arith.constant 0 : i32
    return %c0_i32, %c0_i32_0 : i32, i32
  }
}

</mosaic_0001>

<llo_original>
// kernel: _packed_cost.1
$region0: #{_packed_cost.1}
  #allocation0 [shape = 'u32[]', space=smem, size = 0x4, offset = 0x4, fixed_abs, tag = 'smem constant byte address 0x4 - core index']
  #allocation1 [shape = 'u32[144,128]{1,0:T(1,128)}', space=vmem, size = 0x12000, scoped, tag = 'internal scratch']
  %s0 = inlined_call_operand.vmem [shape: f32[8,128], index: 0, kind: input, shape index: {}]
  %s1 = inlined_call_operand.hbm [shape: f32[1,1], index: 1, kind: output, shape index: {}]
  %s2 = sld [smem:[#allocation0]]
  $region22: #{_packed_cost.1} parent=0
    _
  %s4 = ssub.s32 1, %s2
  %s5 = scalar_select 0, %s4, %s2
  $region1: #{_packed_cost.1} parent=0
    #allocation2 [shape = 'u8[512]{0}', space=smem, size = 0x200, scoped, tag = 'output window, operand 0, single buffered']
    #allocation3 [shape = 's32[1]{0}', space=sflag, size = 0x4, scoped, tag = 'scoped memory for _packed_cost.1']
    %6 = vsyncpa [#allocation3], 0
    // Predicated region
    $region2: #{_packed_cost.1} parent=1 // pred_check
      _
    $region3: #{_packed_cost.1} parent=1 // pred_check_branch
      %8 = sbr.rel (0) target = $region5
    $region4: #{_packed_cost.1} parent=1 // pred_region
      _
    $region5: #{_packed_cost.1} parent=1 // pred_fallthru
      _
    %v9 = vld [vmem:[%s0] sm:$0xff]
    %v11 = vrot.slane %v9, 2
    %v13 = vsub.f32 %v9, %v11
    %v14 = vand.u32 2147483647, %v13
    %v16 = vrot.slane %v14, 1
    %v18 = vadd.f32 %v14, %v16
    %v19 = vmul.f32 %v18, %v18
    %vm20 = vcmask 1040384
    %v21 = vsel %vm20, %v19, 0.0
    %22 = vadd.xlane.f32.xlu0 %v21
    %v23 = vpop.xlane.xlu0 %22
    %v24 = vrot.slane %v23, 4
    %v25 = vadd.f32 %v23, %v24
    %v26 = vrot.slane %v25, 2
    %v27 = vadd.f32 %v25, %v26
    %v28 = vrot.slane %v27, 1
    %v29 = vadd.f32 %v27, %v28
    %s30 = vtos %v29
    %p31 = scmp.eq.s32.totalorder 0, 0
    // Predicated region
    $region6: #{_packed_cost.1} parent=1 // pred_check
      %p32 = pneg %p31
    $region7: #{_packed_cost.1} parent=1 // pred_check_branch
      %34 = sbr.rel (%p32) target = $region9
    $region8: #{_packed_cost.1} parent=1 // pred_region
      %s35 = scalar_lea.smem [#allocation2], 0
      %36 = sst [smem:[%s35]] 0.0
    $region9: #{_packed_cost.1} parent=1 // pred_fallthru
      _
    %s37 = sld [smem:[#allocation2]]
    %s38 = sadd.f32 %s37, %s30
    %s39 = scalar_lea.smem [#allocation2], 0
    %40 = sst [smem:[%s39]] %s38
    // Predicated region
    $region10: #{_packed_cost.1} parent=1 // pred_check
      %p41 = pneg %p31
    $region11: #{_packed_cost.1} parent=1 // pred_check_branch
      %43 = sbr.rel (%p41) target = $region13
    $region12: #{_packed_cost.1} parent=1 // pred_region
      %s44 = sld [smem:[#allocation2]]
      %v45 = vstv %s44
      %v46 = vrsqrt.pop %v45
      %v47 = vmul.f32 %v45, %v46
      %vm48 = vcmp.eq.f32.partialorder %v45, inf
      %v49 = vsel %vm48, %v45, %v47
      %vm50 = vcmp.eq.f32.partialorder %v45, 0.0
      %v51 = vand.u32 %v45, 2147483648
      %v52 = vsel %vm50, %v51, %v49
      %s53 = vtos %v52
      %54 = sst [smem:[%s39]] %s53
    $region13: #{_packed_cost.1} parent=1 // pred_fallthru
      _
    // Predicated region
    $region14: #{_packed_cost.1} parent=1 // pred_check
      _
    $region15: #{_packed_cost.1} parent=1 // pred_check_branch
      %56 = sbr.rel (0) target = $region17
    $region16: #{_packed_cost.1} parent=1 // pred_region
      %s58 = ssub.s32 16, 16
      %59 = vsyncadd [#allocation3], %s58
      %62 = dma.smem_to_hbm [#allocation2], 16, %s1, [#allocation3]
    $region17: #{_packed_cost.1} parent=1 // pred_fallthru
      _
    // Predicated region
    $region18: #{_packed_cost.1} parent=1 // pred_check
      _
    $region19: #{_packed_cost.1} parent=1 // pred_check_branch
      %64 = sbr.rel (0) target = $region21
    $region20: #{_packed_cost.1} parent=1 // pred_region
      %65 = dma.done [#allocation3], 16
    $region21: #{_packed_cost.1} parent=1 // pred_fallthru
      _
    %66 = sfence
    %67 = vsyncpa [#allocation3], 1

</llo_original>
